<compile_context>
chip_gen: v7x
topology: tpu7x:2x2x1
jax: 0.10.0
libtpu: 0.0.40
codegen_flags: <defaults>
</compile_context>

<pallas_src>
import functools

import jax
import jax.numpy as jnp
from jax.experimental import pallas as pl
from jax.experimental.pallas import tpu as pltpu

HIDDEN = 20            # as in the PyTorch module
LANE = 128             # TPU lane width (layer widths / hidden K padded to this)
SUBLANE = 8            # TPU sublane width
MAX_TILE_B = 1024      # max batch tile for the grid


def _round_up(n, m):
    return ((n + m - 1) // m) * m


def _pad2(a, rows, cols):
    r, c = a.shape
    return jnp.pad(a, ((0, rows - r), (0, cols - c)))


def _mlp_softmax_kernel(out_size, x_ref, w1_ref, wh_ref, b_ref, o_ref):
    """One batch tile of the full forward pass (all refs in VMEM).

    x_ref : (TILE_B, KIN8)    flattened, feature-padded inputs
    w1_ref: (KIN8, 128)       layer-1 weight (output lane-padded)
    wh_ref: (3, 128, 128)     layers 2..4 weights, K padded 20 -> 128 (zeros)
    b_ref : (4, 128)          biases of layers 1..4 (lane-padded with zeros)
    o_ref : (TILE_B, 128)     softmax probs (lanes >= out_size are 0)
    """
    # Layer 1: (TILE_B, KIN8) @ (KIN8, 128). Lanes >= HIDDEN come out exactly 0
    # (zero weight cols + zero bias lanes), and ReLU preserves 0, so the
    # following full-128-K matmuls are exact.
    h = jnp.dot(x_ref[...], w1_ref[...],
                preferred_element_type=jnp.float32) + b_ref[0:1, :]
    h = jnp.maximum(h, 0.0)

    for layer in range(2):                      # hidden layers 2 and 3
        h = jnp.dot(h, wh_ref[layer],
                    preferred_element_type=jnp.float32) + b_ref[layer + 1:layer + 2, :]
        h = jnp.maximum(h, 0.0)

    logits = jnp.dot(h, wh_ref[2],
                     preferred_element_type=jnp.float32) + b_ref[3:4, :]

    # Masked softmax over the first `out_size` lanes (rest is lane padding).
    col = jax.lax.broadcasted_iota(jnp.int32, logits.shape, 1)
    valid = col < out_size
    masked = jnp.where(valid, logits, jnp.float32(-1e30))
    m = jnp.max(masked, axis=-1, keepdims=True)
    e = jnp.where(valid, jnp.exp(masked - m), 0.0)
    denom = jnp.sum(e, axis=-1, keepdims=True)
    # Exact normalization (downstream takes log(probs); approx recip is not
    # worth ~1e-3 row-sum error when the kernel is not VPU/EUP bound).
    o_ref[...] = (e / denom).astype(o_ref.dtype)


def prepare_params(params, input_size, param_dtype=jnp.float32):
    """Pad & pack parameters once (call at init / after each param update).

    NOTE: correctness of the full-K=128 hidden matmuls in the kernel depends on
    all padding here being exactly ZERO (weight rows/cols, bias lanes).  Do not
    change the padding value.
    """
    (w1, b1), (w2, b2), (w3, b3), (w4, b4) = params
    assert w1.shape == (input_size, HIDDEN)
    kin8 = _round_up(max(input_size, SUBLANE), SUBLANE)
    w1p = _pad2(w1.astype(param_dtype), kin8, LANE)                     # (kin8, 128)
    whp = jnp.stack([_pad2(w.astype(param_dtype), LANE, LANE)
                     for w in (w2, w3, w4)])                            # (3, 128, 128)
    bsp = jnp.stack([jnp.pad(b.astype(jnp.float32), (0, LANE - b.shape[0]))
                     for b in (b1, b2, b3, b4)])                        # (4, 128)
    return w1p, whp, bsp


@functools.partial(jax.jit, static_argnames=("output_size",))
def nn_forward(x, packed_params, output_size):
    """x: (B, ...) -> softmax probs (B, output_size)."""
    w1p, whp, bsp = packed_params
    B = x.shape[0]
    x2 = x.reshape(B, -1).astype(jnp.float32)          # nn.Flatten
    kin8 = w1p.shape[0]

    assert output_size <= LANE, "output_size must be <= 128 for this kernel"
    assert _round_up(max(x2.shape[1], SUBLANE), SUBLANE) == kin8, \
        "flattened input size does not match packed parameters"

    # Balanced batch tiling: pick the grid first, then the tile size.
    #  - at least 2 tiles once B >= 16 so the "parallel" batch axis lands on
    #    both v7x TensorCores (harmless on 1-TC v5e/v6e),
    #  - tile_b balanced across the grid to minimize padded rows.
    grid_n = max(pl.cdiv(B, MAX_TILE_B), 2 if B >= 16 else 1)
    tile_b = _round_up(pl.cdiv(B, grid_n), SUBLANE)
    b_rows = grid_n * tile_b

    # Skip the pad entirely when it is a no-op (it is a full HBM read+rewrite).
    pad_b = b_rows - B
    pad_f = kin8 - x2.shape[1]
    if pad_b or pad_f:
        xp = jnp.pad(x2, ((0, pad_b), (0, pad_f)))
    else:
        xp = x2

    kernel = functools.partial(_mlp_softmax_kernel, int(output_size))

    out = pl.pallas_call(
        kernel,
        out_shape=jax.ShapeDtypeStruct((b_rows, LANE), jnp.float32),
        grid=(grid_n,),
        in_specs=[
            pl.BlockSpec((tile_b, kin8), lambda i: (i, 0)),
            pl.BlockSpec((kin8, LANE), lambda i: (0, 0)),          # VMEM-resident
            pl.BlockSpec((3, LANE, LANE), lambda i: (0, 0, 0)),    # VMEM-resident
            pl.BlockSpec((4, LANE), lambda i: (0, 0)),             # VMEM-resident
        ],
        out_specs=pl.BlockSpec((tile_b, LANE), lambda i: (i, 0)),
        compiler_params=pltpu.CompilerParams(
            dimension_semantics=("parallel",)),
    )(xp, w1p, whp, bsp)

    return out[:B, :output_size]


def init_params(key, input_size, output_size):
    """Deterministic init mirroring nn.Linear's default U(-1/sqrt(fan_in), ...)."""
    dims = [(input_size, HIDDEN), (HIDDEN, HIDDEN), (HIDDEN, HIDDEN), (HIDDEN, output_size)]
    params = []
    for fan_in, fan_out in dims:
        key, kw, kb = jax.random.split(key, 3)
        bound = 1.0 / jnp.sqrt(jnp.float32(fan_in))
        w = jax.random.uniform(kw, (fan_in, fan_out), jnp.float32, -bound, bound)
        b = jax.random.uniform(kb, (fan_out,), jnp.float32, -bound, bound)
        params.append((w, b))
    return params


if __name__ == "__main__":
    key = jax.random.PRNGKey(0)
    k_x, k_p, k_xb = jax.random.split(key, 3)

    input_size = 4 * 4
    output_size = 4

    params = init_params(k_p, input_size, output_size)
    packed = prepare_params(params, input_size)       # pad/pack once, not per call

    def ref(x, params):
        h = x.reshape(x.shape[0], -1)
        (w1, b1), (w2, b2), (w3, b3), (w4, b4) = params
        h = jnp.maximum(h @ w1 + b1, 0.0)
        h = jnp.maximum(h @ w2 + b2, 0.0)
        h = jnp.maximum(h @ w3 + b3, 0.0)
        return jax.nn.softmax(h @ w4 + b4, axis=-1)

    # Small case: batch=2, obs of shape (4, 4) flattened to 16 features.
    x = jax.random.normal(k_x, (2, 4, 4), dtype=jnp.float32)
    probs = jax.block_until_ready(nn_forward(x, packed, output_size))
    expected = ref(x, params)
    assert probs.shape == (2, output_size)
    assert jnp.allclose(probs, expected, atol=1e-4, rtol=1e-4)
    assert jnp.allclose(jnp.sum(probs, axis=-1), 1.0, atol=1e-5)

    # Larger rollout batch exercising the batch grid (2 balanced tiles of 152).
    xb = jax.random.normal(k_xb, (300, 4, 4), dtype=jnp.float32)
    probs_b = jax.block_until_ready(nn_forward(xb, packed, output_size))
    expected_b = ref(xb, params)
    assert probs_b.shape == (300, output_size)
    assert jnp.allclose(probs_b, expected_b, atol=1e-4, rtol=1e-4)
    assert jnp.allclose(jnp.sum(probs_b, axis=-1), 1.0, atol=1e-5)

    print("KERNEL_OK")
</pallas_src>

<mosaic_0001>
module attributes {stable_mosaic.version = 11 : i64} {
  func.func @_mlp_softmax_kernel(%arg0: i32, %arg1: memref<8x16xf32, #tpu.memory_space<vmem>>, %arg2: memref<16x128xf32, #tpu.memory_space<vmem>>, %arg3: memref<3x128x128xf32, #tpu.memory_space<vmem>>, %arg4: memref<4x128xf32, #tpu.memory_space<vmem>>, %arg5: memref<8x128xf32, #tpu.memory_space<vmem>>) attributes {dimension_semantics = [#tpu.dimension_semantics<parallel>], iteration_bounds = array<i64: 1>, scalar_prefetch = 0 : i64, scratch_operands = 0 : i64, tpu.core_type = #tpu.core_type<tc>, window_params = [{transform_indices = @transform_0, window_bounds = array<i64: 8, 16>}, {pipeline_mode = #tpu.pipeline_mode<synchronous>, transform_indices = @transform_1, window_bounds = array<i64: 16, 128>}, {pipeline_mode = #tpu.pipeline_mode<synchronous>, transform_indices = @transform_2, window_bounds = array<i64: 3, 128, 128>}, {pipeline_mode = #tpu.pipeline_mode<synchronous>, transform_indices = @transform_3, window_bounds = array<i64: 4, 128>}, {transform_indices = @transform_4, window_bounds = array<i64: 8, 128>}]} {
    %c0 = arith.constant 0 : index
    %c0_0 = arith.constant 0 : index
    %0 = vector.load %arg1[%c0, %c0_0] : memref<8x16xf32, #tpu.memory_space<vmem>>, vector<8x16xf32>
    %c0_1 = arith.constant 0 : index
    %c0_2 = arith.constant 0 : index
    %1 = vector.load %arg2[%c0_1, %c0_2] : memref<16x128xf32, #tpu.memory_space<vmem>>, vector<16x128xf32>
    %cst = arith.constant dense<0.000000e+00> : vector<8x128xf32>
    %2 = tpu.matmul %0, %1, %cst {dimension_numbers = #tpu.dot_dimension_numbers<[1], [0], [0], [1], [0, 0, 1, 1], [], []>} : vector<8x16xf32>, vector<16x128xf32>, vector<8x128xf32> -> vector<8x128xf32>
    %c0_3 = arith.constant 0 : index
    %c0_4 = arith.constant 0 : index
    %3 = vector.load %arg4[%c0_3, %c0_4] : memref<4x128xf32, #tpu.memory_space<vmem>>, vector<1x128xf32>
    %4 = vector.broadcast %3 : vector<1x128xf32> to vector<8x128xf32>
    %5 = arith.addf %2, %4 : vector<8x128xf32>
    %cst_5 = arith.constant 0.000000e+00 : f32
    %6 = vector.broadcast %cst_5 : f32 to vector<8x128xf32>
    %7 = arith.maximumf %5, %6 : vector<8x128xf32>
    %c0_6 = arith.constant 0 : index
    %c0_7 = arith.constant 0 : index
    %c0_8 = arith.constant 0 : index
    %8 = vector.load %arg3[%c0_6, %c0_7, %c0_8] : memref<3x128x128xf32, #tpu.memory_space<vmem>>, vector<1x128x128xf32>
    %9 = vector.shape_cast %8 : vector<1x128x128xf32> to vector<128x128xf32>
    %cst_9 = arith.constant dense<0.000000e+00> : vector<8x128xf32>
    %10 = tpu.matmul %7, %9, %cst_9 {dimension_numbers = #tpu.dot_dimension_numbers<[1], [0], [0], [1], [0, 0, 1, 1], [], []>} : vector<8x128xf32>, vector<128x128xf32>, vector<8x128xf32> -> vector<8x128xf32>
    %c1 = arith.constant 1 : index
    %c0_10 = arith.constant 0 : index
    %11 = vector.load %arg4[%c1, %c0_10] : memref<4x128xf32, #tpu.memory_space<vmem>>, vector<1x128xf32>
    %12 = vector.broadcast %11 : vector<1x128xf32> to vector<8x128xf32>
    %13 = arith.addf %10, %12 : vector<8x128xf32>
    %cst_11 = arith.constant 0.000000e+00 : f32
    %14 = vector.broadcast %cst_11 : f32 to vector<8x128xf32>
    %15 = arith.maximumf %13, %14 : vector<8x128xf32>
    %c1_12 = arith.constant 1 : index
    %c0_13 = arith.constant 0 : index
    %c0_14 = arith.constant 0 : index
    %16 = vector.load %arg3[%c1_12, %c0_13, %c0_14] : memref<3x128x128xf32, #tpu.memory_space<vmem>>, vector<1x128x128xf32>
    %17 = vector.shape_cast %16 : vector<1x128x128xf32> to vector<128x128xf32>
    %cst_15 = arith.constant dense<0.000000e+00> : vector<8x128xf32>
    %18 = tpu.matmul %15, %17, %cst_15 {dimension_numbers = #tpu.dot_dimension_numbers<[1], [0], [0], [1], [0, 0, 1, 1], [], []>} : vector<8x128xf32>, vector<128x128xf32>, vector<8x128xf32> -> vector<8x128xf32>
    %c2 = arith.constant 2 : index
    %c0_16 = arith.constant 0 : index
    %19 = vector.load %arg4[%c2, %c0_16] : memref<4x128xf32, #tpu.memory_space<vmem>>, vector<1x128xf32>
    %20 = vector.broadcast %19 : vector<1x128xf32> to vector<8x128xf32>
    %21 = arith.addf %18, %20 : vector<8x128xf32>
    %cst_17 = arith.constant 0.000000e+00 : f32
    %22 = vector.broadcast %cst_17 : f32 to vector<8x128xf32>
    %23 = arith.maximumf %21, %22 : vector<8x128xf32>
    %c2_18 = arith.constant 2 : index
    %c0_19 = arith.constant 0 : index
    %c0_20 = arith.constant 0 : index
    %24 = vector.load %arg3[%c2_18, %c0_19, %c0_20] : memref<3x128x128xf32, #tpu.memory_space<vmem>>, vector<1x128x128xf32>
    %25 = vector.shape_cast %24 : vector<1x128x128xf32> to vector<128x128xf32>
    %cst_21 = arith.constant dense<0.000000e+00> : vector<8x128xf32>
    %26 = tpu.matmul %23, %25, %cst_21 {dimension_numbers = #tpu.dot_dimension_numbers<[1], [0], [0], [1], [0, 0, 1, 1], [], []>} : vector<8x128xf32>, vector<128x128xf32>, vector<8x128xf32> -> vector<8x128xf32>
    %c3 = arith.constant 3 : index
    %c0_22 = arith.constant 0 : index
    %27 = vector.load %arg4[%c3, %c0_22] : memref<4x128xf32, #tpu.memory_space<vmem>>, vector<1x128xf32>
    %28 = vector.broadcast %27 : vector<1x128xf32> to vector<8x128xf32>
    %29 = arith.addf %26, %28 : vector<8x128xf32>
    %30 = tpu.iota {dimensions = array<i32: 1>} : vector<8x128xi32>
    %c4_i32 = arith.constant 4 : i32
    %31 = vector.broadcast %c4_i32 : i32 to vector<8x128xi32>
    %32 = arith.cmpi slt, %30, %31 : vector<8x128xi32>
    %cst_23 = arith.constant -1.000000e+30 : f32
    %33 = vector.broadcast %cst_23 : f32 to vector<8x128xf32>
    %34 = arith.select %32, %29, %33 : vector<8x128xi1>, vector<8x128xf32>
    %cst_24 = arith.constant dense<0xFF800000> : vector<8xf32>
    %35 = vector.multi_reduction <maximumf>, %34, %cst_24 [1] : vector<8x128xf32> to vector<8xf32>
    %36 = vector.shape_cast %35 : vector<8xf32> to vector<8x1xf32>
    %37 = vector.broadcast %36 : vector<8x1xf32> to vector<8x128xf32>
    %38 = arith.subf %34, %37 : vector<8x128xf32>
    %39 = math.exp %38 : vector<8x128xf32>
    %cst_25 = arith.constant 0.000000e+00 : f32
    %40 = vector.broadcast %cst_25 : f32 to vector<8x128xf32>
    %41 = arith.select %32, %39, %40 : vector<8x128xi1>, vector<8x128xf32>
    %cst_26 = arith.constant dense<0.000000e+00> : vector<8xf32>
    %42 = vector.multi_reduction <add>, %41, %cst_26 [1] : vector<8x128xf32> to vector<8xf32>
    %43 = vector.shape_cast %42 : vector<8xf32> to vector<8x1xf32>
    %44 = vector.broadcast %43 : vector<8x1xf32> to vector<8x128xf32>
    %45 = arith.divf %41, %44 : vector<8x128xf32>
    %c0_27 = arith.constant 0 : index
    %c0_28 = arith.constant 0 : index
    %46 = vector.load %arg5[%c0_27, %c0_28] : memref<8x128xf32, #tpu.memory_space<vmem>>, vector<8x128xf32>
    tpu.vector_store %arg5[%c0_27, %c0_28], %45 {strides = array<i32>} : memref<8x128xf32, #tpu.memory_space<vmem>>, vector<8x128xf32>,
    return
  }
  func.func @transform_0(%arg0: i32) -> (i32, i32) {
    %c0_i32 = arith.constant 0 : i32
    %c0_i32_0 = arith.constant 0 : i32
    return %arg0, %c0_i32 : i32, i32
  }
  func.func @transform_1(%arg0: i32) -> (i32, i32) {
    %c0_i32 = arith.constant 0 : i32
    %c0_i32_0 = arith.constant 0 : i32
    %c0_i32_1 = arith.constant 0 : i32
    return %c0_i32, %c0_i32_0 : i32, i32
  }
  func.func @transform_2(%arg0: i32) -> (i32, i32, i32) {
    %c0_i32 = arith.constant 0 : i32
    %c0_i32_0 = arith.constant 0 : i32
    %c0_i32_1 = arith.constant 0 : i32
    %c0_i32_2 = arith.constant 0 : i32
    return %c0_i32, %c0_i32_0, %c0_i32_1 : i32, i32, i32
  }
  func.func @transform_3(%arg0: i32) -> (i32, i32) {
    %c0_i32 = arith.constant 0 : i32
    %c0_i32_0 = arith.constant 0 : i32
    %c0_i32_1 = arith.constant 0 : i32
    return %c0_i32, %c0_i32_0 : i32, i32
  }
  func.func @transform_4(%arg0: i32) -> (i32, i32) {
    %c0_i32 = arith.constant 0 : i32
    %c0_i32_0 = arith.constant 0 : i32
    return %arg0, %c0_i32 : i32, i32
  }
}

</mosaic_0001>

<llo_original>
// kernel: nn_forward.1
$region0: #{nn_forward.1}
  #allocation0 [shape = 'u32[]', space=smem, size = 0x4, offset = 0x4, fixed_abs, tag = 'smem constant byte address 0x4 - core index']
  #allocation1 [shape = 'u32[144,128]{1,0:T(1,128)}', space=vmem, size = 0x12000, scoped, tag = 'internal scratch']
  %s0 = inlined_call_operand.vmem [shape: f32[8,16], index: 0, kind: input, shape index: {}]
  %s1 = inlined_call_operand.vmem [shape: f32[16,128], index: 1, kind: input, shape index: {}]
  %s2 = inlined_call_operand.hbm [shape: f32[3,128,128], index: 2, kind: input, shape index: {}]
  %s3 = inlined_call_operand.vmem [shape: f32[4,128], index: 3, kind: input, shape index: {}]
  %s4 = inlined_call_operand.vmem [shape: f32[8,128], index: 4, kind: output, shape index: {}]
  %s5 = sld [smem:[#allocation0]]
  $region30: #{nn_forward.1} parent=0
    _
  %s7 = ssub.s32 1, %s5
  %s8 = scalar_select 0, %s7, %s5
  $region1: #{nn_forward.1} parent=0
    #allocation2 [shape = 'u8[196608]{0}', space=vmem, size = 0x30000, scoped, tag = 'input window, operand 2, single buffered']
    #allocation3 [shape = 's32[1]{0}', space=sflag, size = 0x4, scoped, tag = 'scoped memory for nn_forward.1']
    %9 = vsyncpa [#allocation3], 0
    // Predicated region
    $region2: #{nn_forward.1} parent=1 // pred_check
      _
    $region3: #{nn_forward.1} parent=1 // pred_check_branch
      %11 = sbr.rel (0) target = $region5
    $region4: #{nn_forward.1} parent=1 // pred_region
      _
    $region5: #{nn_forward.1} parent=1 // pred_fallthru
      _
    // Predicated region
    $region6: #{nn_forward.1} parent=1 // pred_check
      _
    $region7: #{nn_forward.1} parent=1 // pred_check_branch
      %13 = sbr.rel (0) target = $region9
    $region8: #{nn_forward.1} parent=1 // pred_region
      _
    $region9: #{nn_forward.1} parent=1 // pred_fallthru
      _
    // Predicated region
    $region10: #{nn_forward.1} parent=1 // pred_check
      _
    $region11: #{nn_forward.1} parent=1 // pred_check_branch
      %15 = sbr.rel (0) target = $region13
    $region12: #{nn_forward.1} parent=1 // pred_region
      %s17 = ssub.s32 6144, 6144
      %18 = vsyncadd [#allocation3], %s17
      %s19 = sshll.u32 [#allocation2], 4
      %s20 = int_to_ptr.vmem [resolvable:$true] %s19
      %25 = dma.hbm_to_vmem [thread:$0]  %s2, 6144, %s20, [#allocation3], 128, 128, 8
    $region13: #{nn_forward.1} parent=1 // pred_fallthru
      _
    // Predicated region
    $region14: #{nn_forward.1} parent=1 // pred_check
      _
    $region15: #{nn_forward.1} parent=1 // pred_check_branch
      %27 = sbr.rel (0) target = $region17
    $region16: #{nn_forward.1} parent=1 // pred_region
      _
    $region17: #{nn_forward.1} parent=1 // pred_fallthru
      _
    // Predicated region
    $region18: #{nn_forward.1} parent=1 // pred_check
      _
    $region19: #{nn_forward.1} parent=1 // pred_check_branch
      %29 = sbr.rel (0) target = $region21
    $region20: #{nn_forward.1} parent=1 // pred_region
      %30 = dma.done [#allocation3], 6144
    $region21: #{nn_forward.1} parent=1 // pred_fallthru
      _
    %v31 = vld [vmem:[%s0] sm:$0xff]
    %v32 = vld [vmem:[%s1] sm:$0xff]
    %v33 = vld [vmem:[%s1 + $0x8] sm:$0xff]
    %v34 = vld [vmem:[%s3] sm:$0x1]
    %v35 = vlaneseq
    %v36 = vshrl.u32 %v35, 7
    %v37 = vsub.s32 0, %v36
    %v38 = vrot.slane %v34, %v37
    %vm39 = vcmask 130048
    %v41 = vsel %vm39, %v31, 0
    %43 = vmatprep.subr.mxu0 0.0
    %44 = vmatpush1.msra.mxu0 %v32
    %45 = vmatprep.subr.mxu0 0.0
    %46 = vmatpush1.msra.mxu0 %v33
    %47 = vmatprep.subr.mxu0 0.0
    %48 = vmatpush1.msra.mxu0 0.0
    %49 = vmatprep.subr.mxu0 0.0
    %50 = vmatpush1.msra.mxu0 0.0
    %51 = vmatprep.subr.mxu0 0.0
    %52 = vmatpush1.msra.mxu0 0.0
    %53 = vmatprep.subr.mxu0 0.0
    %54 = vmatpush1.msra.mxu0 0.0
    %55 = vmatprep.subr.mxu0 0.0
    %56 = vmatpush1.msra.mxu0 0.0
    %57 = vmatprep.subr.mxu0 0.0
    %58 = vmatpush1.msra.mxu0 0.0
    %59 = vmatprep.subr.mxu0 0.0
    %60 = vmatpush1.msra.mxu0 0.0
    %61 = vmatprep.subr.mxu0 0.0
    %62 = vmatpush1.msra.mxu0 0.0
    %63 = vmatprep.subr.mxu0 0.0
    %64 = vmatpush1.msra.mxu0 0.0
    %65 = vmatprep.subr.mxu0 0.0
    %66 = vmatpush1.msra.mxu0 0.0
    %67 = vmatprep.subr.mxu0 0.0
    %68 = vmatpush1.msra.mxu0 0.0
    %69 = vmatprep.subr.mxu0 0.0
    %70 = vmatpush1.msra.mxu0 0.0
    %71 = vmatprep.subr.mxu0 0.0
    %72 = vmatpush1.msra.mxu0 0.0
    %73 = vmatprep.subr.mxu0 0.0
    %74 = vmatpush1.msra.mxu0 0.0
    %75 = vmatprep.subr.mxu0 0.0
    %76 = vmatpush1.msra.mxu0 0.0
    %77 = vmatprep.subr.mxu0 0.0
    %78 = vmatpush1.msra.mxu0 0.0
    %79 = vmatprep.subr.mxu0 0.0
    %80 = vmatpush1.msra.mxu0 0.0
    %81 = vmatprep.subr.mxu0 0.0
    %82 = vmatpush1.msra.mxu0 0.0
    %83 = vmatprep.subr.mxu0 0.0
    %84 = vmatpush1.msra.mxu0 0.0
    %85 = vmatprep.subr.mxu0 0.0
    %86 = vmatpush1.msra.mxu0 0.0
    %87 = vmatprep.subr.mxu0 0.0
    %88 = vmatpush1.msra.mxu0 0.0
    %89 = vmatprep.subr.mxu0 0.0
    %90 = vmatpush1.msra.mxu0 0.0
    %91 = vmatprep.subr.mxu0 0.0
    %92 = vmatpush1.msra.mxu0 0.0
    %93 = vmatprep.subr.mxu0 0.0
    %94 = vmatpush1.msra.mxu0 0.0
    %95 = vmatprep.subr.mxu0 0.0
    %96 = vmatpush1.msra.mxu0 0.0
    %97 = vmatprep.subr.mxu0 0.0
    %98 = vmatpush1.msra.mxu0 0.0
    %99 = vmatprep.subr.mxu0 0.0
    %100 = vmatpush1.msra.mxu0 0.0
    %101 = vmatprep.subr.mxu0 0.0
    %102 = vmatpush1.msra.mxu0 0.0
    %103 = vmatprep.subr.mxu0 0.0
    %104 = vmatpush1.msra.mxu0 0.0
    %105 = vmatprep.subr.mxu0 0.0
    %106 = vmatpush1.msra.mxu0 0.0
    %107 = vmatprep.mubr.f32.mxu0 0.0
    %108 = vmatmul.mubr.f32.gmra.mrb[0].mxu0 %v41
    %v109 = vpop.f32.mrb[0].mxu0
    %v110 = vadd.f32 %v38, %v109
    %v111 = vpop.f32.mrb[0].mxu0
    %112 = vdwg.mxu0
    %v113 = vmax.f32 %v110, 0.0
    %v114 = vld [vmem:[#allocation2] sm:$0xff]
    %v115 = vld [vmem:[#allocation2 + $0x8] sm:$0xff]
    %v116 = vld [vmem:[#allocation2 + $0x10] sm:$0xff]
    %v117 = vld [vmem:[#allocation2 + $0x18] sm:$0xff]
    %v118 = vld [vmem:[#allocation2 + $0x20] sm:$0xff]
    %v119 = vld [vmem:[#allocation2 + $0x28] sm:$0xff]
    %v120 = vld [vmem:[#allocation2 + $0x30] sm:$0xff]
    %v121 = vld [vmem:[#allocation2 + $0x38] sm:$0xff]
    %v122 = vld [vmem:[#allocation2 + $0x40] sm:$0xff]
    %v123 = vld [vmem:[#allocation2 + $0x48] sm:$0xff]
    %v124 = vld [vmem:[#allocation2 + $0x50] sm:$0xff]
    %v125 = vld [vmem:[#allocation2 + $0x58] sm:$0xff]
    %v126 = vld [vmem:[#allocation2 + $0x60] sm:$0xff]
    %v127 = vld [vmem:[#allocation2 + $0x68] sm:$0xff]
    %v128 = vld [vmem:[#allocation2 + $0x70] sm:$0xff]
    %v129 = vld [vmem:[#allocation2 + $0x78] sm:$0xff]
    %v130 = vld [vmem:[%s3 + $0x1] sm:$0x1]
    %v131 = vlaneseq
    %v132 = vshrl.u32 %v131, 7
    %v133 = vsub.s32 0, %v132
    %v134 = vrot.slane %v130, %v133
    %135 = vmatprep.subr.mxu0 0.0
    %136 = vmatpush1.msra.mxu0 %v114
    %137 = vmatprep.subr.mxu0 0.0
    %138 = vmatpush1.msra.mxu0 %v115
    %139 = vmatprep.subr.mxu0 0.0
    %140 = vmatpush1.msra.mxu0 %v116
    %141 = vmatprep.subr.mxu0 0.0
    %142 = vmatpush1.msra.mxu0 %v117
    %143 = vmatprep.subr.mxu0 0.0
    %144 = vmatpush1.msra.mxu0 %v118
    %145 = vmatprep.subr.mxu0 0.0
    %146 = vmatpush1.msra.mxu0 %v119
    %147 = vmatprep.subr.mxu0 0.0
    %148 = vmatpush1.msra.mxu0 %v120
    %149 = vmatprep.subr.mxu0 0.0
    %150 = vmatpush1.msra.mxu0 %v121
    %151 = vmatprep.subr.mxu0 0.0
    %152 = vmatpush1.msra.mxu0 %v122
    %153 = vmatprep.subr.mxu0 0.0
    %154 = vmatpush1.msra.mxu0 %v123
    %155 = vmatprep.subr.mxu0 0.0
    %156 = vmatpush1.msra.mxu0 %v124
    %157 = vmatprep.subr.mxu0 0.0
    %158 = vmatpush1.msra.mxu0 %v125
    %159 = vmatprep.subr.mxu0 0.0
    %160 = vmatpush1.msra.mxu0 %v126
    %161 = vmatprep.subr.mxu0 0.0
    %162 = vmatpush1.msra.mxu0 %v127
    %163 = vmatprep.subr.mxu0 0.0
    %164 = vmatpush1.msra.mxu0 %v128
    %165 = vmatprep.subr.mxu0 0.0
    %166 = vmatpush1.msra.mxu0 %v129
    %167 = vmatprep.subr.mxu0 0.0
    %168 = vmatpush1.msra.mxu0 0.0
    %169 = vmatprep.subr.mxu0 0.0
    %170 = vmatpush1.msra.mxu0 0.0
    %171 = vmatprep.subr.mxu0 0.0
    %172 = vmatpush1.msra.mxu0 0.0
    %173 = vmatprep.subr.mxu0 0.0
    %174 = vmatpush1.msra.mxu0 0.0
    %175 = vmatprep.subr.mxu0 0.0
    %176 = vmatpush1.msra.mxu0 0.0
    %177 = vmatprep.subr.mxu0 0.0
    %178 = vmatpush1.msra.mxu0 0.0
    %179 = vmatprep.subr.mxu0 0.0
    %180 = vmatpush1.msra.mxu0 0.0
    %181 = vmatprep.subr.mxu0 0.0
    %182 = vmatpush1.msra.mxu0 0.0
    %183 = vmatprep.subr.mxu0 0.0
    %184 = vmatpush1.msra.mxu0 0.0
    %185 = vmatprep.subr.mxu0 0.0
    %186 = vmatpush1.msra.mxu0 0.0
    %187 = vmatprep.subr.mxu0 0.0
    %188 = vmatpush1.msra.mxu0 0.0
    %189 = vmatprep.subr.mxu0 0.0
    %190 = vmatpush1.msra.mxu0 0.0
    %191 = vmatprep.subr.mxu0 0.0
    %192 = vmatpush1.msra.mxu0 0.0
    %193 = vmatprep.subr.mxu0 0.0
    %194 = vmatpush1.msra.mxu0 0.0
    %195 = vmatprep.subr.mxu0 0.0
    %196 = vmatpush1.msra.mxu0 0.0
    %197 = vmatprep.subr.mxu0 0.0
    %198 = vmatpush1.msra.mxu0 0.0
    %199 = vmatprep.mubr.f32.mxu0 0.0
    %200 = vmatmul.mubr.f32.gmra.mrb[0].mxu0 %v113
    %v201 = vpop.f32.mrb[0].mxu0
    %v202 = vadd.f32 %v134, %v201
    %v203 = vpop.f32.mrb[0].mxu0
    %204 = vdwg.mxu0
    %v205 = vmax.f32 %v202, 0.0
    %s206 = scalar_lea.vmem [#allocation2], 128
    %v207 = vld [vmem:[%s206] sm:$0xff]
    %v208 = vld [vmem:[%s206 + $0x8] sm:$0xff]
    %v209 = vld [vmem:[%s206 + $0x10] sm:$0xff]
    %v210 = vld [vmem:[%s206 + $0x18] sm:$0xff]
    %v211 = vld [vmem:[%s206 + $0x20] sm:$0xff]
    %v212 = vld [vmem:[%s206 + $0x28] sm:$0xff]
    %v213 = vld [vmem:[%s206 + $0x30] sm:$0xff]
    %v214 = vld [vmem:[%s206 + $0x38] sm:$0xff]
    %v215 = vld [vmem:[%s206 + $0x40] sm:$0xff]
    %v216 = vld [vmem:[%s206 + $0x48] sm:$0xff]
    %v217 = vld [vmem:[%s206 + $0x50] sm:$0xff]
    %v218 = vld [vmem:[%s206 + $0x58] sm:$0xff]
    %v219 = vld [vmem:[%s206 + $0x60] sm:$0xff]
    %v220 = vld [vmem:[%s206 + $0x68] sm:$0xff]
    %v221 = vld [vmem:[%s206 + $0x70] sm:$0xff]
    %v222 = vld [vmem:[%s206 + $0x78] sm:$0xff]
    %v223 = vld [vmem:[%s3 + $0x2] sm:$0x1]
    %v224 = vlaneseq
    %v225 = vshrl.u32 %v224, 7
    %v226 = vsub.s32 0, %v225
    %v227 = vrot.slane %v223, %v226
    %228 = vmatprep.subr.mxu0 0.0
    %229 = vmatpush1.msra.mxu0 %v207
    %230 = vmatprep.subr.mxu0 0.0
    %231 = vmatpush1.msra.mxu0 %v208
    %232 = vmatprep.subr.mxu0 0.0
    %233 = vmatpush1.msra.mxu0 %v209
    %234 = vmatprep.subr.mxu0 0.0
    %235 = vmatpush1.msra.mxu0 %v210
    %236 = vmatprep.subr.mxu0 0.0
    %237 = vmatpush1.msra.mxu0 %v211
    %238 = vmatprep.subr.mxu0 0.0
    %239 = vmatpush1.msra.mxu0 %v212
    %240 = vmatprep.subr.mxu0 0.0
    %241 = vmatpush1.msra.mxu0 %v213
    %242 = vmatprep.subr.mxu0 0.0
    %243 = vmatpush1.msra.mxu0 %v214
    %244 = vmatprep.subr.mxu0 0.0
    %245 = vmatpush1.msra.mxu0 %v215
    %246 = vmatprep.subr.mxu0 0.0
    %247 = vmatpush1.msra.mxu0 %v216
    %248 = vmatprep.subr.mxu0 0.0
    %249 = vmatpush1.msra.mxu0 %v217
    %250 = vmatprep.subr.mxu0 0.0
    %251 = vmatpush1.msra.mxu0 %v218
    %252 = vmatprep.subr.mxu0 0.0
    %253 = vmatpush1.msra.mxu0 %v219
    %254 = vmatprep.subr.mxu0 0.0
    %255 = vmatpush1.msra.mxu0 %v220
    %256 = vmatprep.subr.mxu0 0.0
    %257 = vmatpush1.msra.mxu0 %v221
    %258 = vmatprep.subr.mxu0 0.0
    %259 = vmatpush1.msra.mxu0 %v222
    %260 = vmatprep.subr.mxu0 0.0
    %261 = vmatpush1.msra.mxu0 0.0
    %262 = vmatprep.subr.mxu0 0.0
    %263 = vmatpush1.msra.mxu0 0.0
    %264 = vmatprep.subr.mxu0 0.0
    %265 = vmatpush1.msra.mxu0 0.0
    %266 = vmatprep.subr.mxu0 0.0
    %267 = vmatpush1.msra.mxu0 0.0
    %268 = vmatprep.subr.mxu0 0.0
    %269 = vmatpush1.msra.mxu0 0.0
    %270 = vmatprep.subr.mxu0 0.0
    %271 = vmatpush1.msra.mxu0 0.0
    %272 = vmatprep.subr.mxu0 0.0
    %273 = vmatpush1.msra.mxu0 0.0
    %274 = vmatprep.subr.mxu0 0.0
    %275 = vmatpush1.msra.mxu0 0.0
    %276 = vmatprep.subr.mxu0 0.0
    %277 = vmatpush1.msra.mxu0 0.0
    %278 = vmatprep.subr.mxu0 0.0
    %279 = vmatpush1.msra.mxu0 0.0
    %280 = vmatprep.subr.mxu0 0.0
    %281 = vmatpush1.msra.mxu0 0.0
    %282 = vmatprep.subr.mxu0 0.0
    %283 = vmatpush1.msra.mxu0 0.0
    %284 = vmatprep.subr.mxu0 0.0
    %285 = vmatpush1.msra.mxu0 0.0
    %286 = vmatprep.subr.mxu0 0.0
    %287 = vmatpush1.msra.mxu0 0.0
    %288 = vmatprep.subr.mxu0 0.0
    %289 = vmatpush1.msra.mxu0 0.0
    %290 = vmatprep.subr.mxu0 0.0
    %291 = vmatpush1.msra.mxu0 0.0
    %292 = vmatprep.mubr.f32.mxu0 0.0
    %293 = vmatmul.mubr.f32.gmra.mrb[0].mxu0 %v205
    %v294 = vpop.f32.mrb[0].mxu0
    %v295 = vadd.f32 %v227, %v294
    %v296 = vpop.f32.mrb[0].mxu0
    %297 = vdwg.mxu0
    %v298 = vmax.f32 %v295, 0.0
    %s299 = scalar_lea.vmem [#allocation2], 256
    %v300 = vld [vmem:[%s299] sm:$0xff]
    %v301 = vld [vmem:[%s299 + $0x8] sm:$0xff]
    %v302 = vld [vmem:[%s299 + $0x10] sm:$0xff]
    %v303 = vld [vmem:[%s299 + $0x18] sm:$0xff]
    %v304 = vld [vmem:[%s299 + $0x20] sm:$0xff]
    %v305 = vld [vmem:[%s299 + $0x28] sm:$0xff]
    %v306 = vld [vmem:[%s299 + $0x30] sm:$0xff]
    %v307 = vld [vmem:[%s299 + $0x38] sm:$0xff]
    %v308 = vld [vmem:[%s299 + $0x40] sm:$0xff]
    %v309 = vld [vmem:[%s299 + $0x48] sm:$0xff]
    %v310 = vld [vmem:[%s299 + $0x50] sm:$0xff]
    %v311 = vld [vmem:[%s299 + $0x58] sm:$0xff]
    %v312 = vld [vmem:[%s299 + $0x60] sm:$0xff]
    %v313 = vld [vmem:[%s299 + $0x68] sm:$0xff]
    %v314 = vld [vmem:[%s299 + $0x70] sm:$0xff]
    %v315 = vld [vmem:[%s299 + $0x78] sm:$0xff]
    %v316 = vld [vmem:[%s3 + $0x3] sm:$0x1]
    %v317 = vlaneseq
    %v318 = vshrl.u32 %v317, 7
    %v319 = vsub.s32 0, %v318
    %v320 = vrot.slane %v316, %v319
    %321 = vmatprep.subr.mxu0 0.0
    %322 = vmatpush1.msra.mxu0 %v300
    %323 = vmatprep.subr.mxu0 0.0
    %324 = vmatpush1.msra.mxu0 %v301
    %325 = vmatprep.subr.mxu0 0.0
    %326 = vmatpush1.msra.mxu0 %v302
    %327 = vmatprep.subr.mxu0 0.0
    %328 = vmatpush1.msra.mxu0 %v303
    %329 = vmatprep.subr.mxu0 0.0
    %330 = vmatpush1.msra.mxu0 %v304
    %331 = vmatprep.subr.mxu0 0.0
    %332 = vmatpush1.msra.mxu0 %v305
    %333 = vmatprep.subr.mxu0 0.0
    %334 = vmatpush1.msra.mxu0 %v306
    %335 = vmatprep.subr.mxu0 0.0
    %336 = vmatpush1.msra.mxu0 %v307
    %337 = vmatprep.subr.mxu0 0.0
    %338 = vmatpush1.msra.mxu0 %v308
    %339 = vmatprep.subr.mxu0 0.0
    %340 = vmatpush1.msra.mxu0 %v309
    %341 = vmatprep.subr.mxu0 0.0
    %342 = vmatpush1.msra.mxu0 %v310
    %343 = vmatprep.subr.mxu0 0.0
    %344 = vmatpush1.msra.mxu0 %v311
    %345 = vmatprep.subr.mxu0 0.0
    %346 = vmatpush1.msra.mxu0 %v312
    %347 = vmatprep.subr.mxu0 0.0
    %348 = vmatpush1.msra.mxu0 %v313
    %349 = vmatprep.subr.mxu0 0.0
    %350 = vmatpush1.msra.mxu0 %v314
    %351 = vmatprep.subr.mxu0 0.0
    %352 = vmatpush1.msra.mxu0 %v315
    %353 = vmatprep.subr.mxu0 0.0
    %354 = vmatpush1.msra.mxu0 0.0
    %355 = vmatprep.subr.mxu0 0.0
    %356 = vmatpush1.msra.mxu0 0.0
    %357 = vmatprep.subr.mxu0 0.0
    %358 = vmatpush1.msra.mxu0 0.0
    %359 = vmatprep.subr.mxu0 0.0
    %360 = vmatpush1.msra.mxu0 0.0
    %361 = vmatprep.subr.mxu0 0.0
    %362 = vmatpush1.msra.mxu0 0.0
    %363 = vmatprep.subr.mxu0 0.0
    %364 = vmatpush1.msra.mxu0 0.0
    %365 = vmatprep.subr.mxu0 0.0
    %366 = vmatpush1.msra.mxu0 0.0
    %367 = vmatprep.subr.mxu0 0.0
    %368 = vmatpush1.msra.mxu0 0.0
    %369 = vmatprep.subr.mxu0 0.0
    %370 = vmatpush1.msra.mxu0 0.0
    %371 = vmatprep.subr.mxu0 0.0
    %372 = vmatpush1.msra.mxu0 0.0
    %373 = vmatprep.subr.mxu0 0.0
    %374 = vmatpush1.msra.mxu0 0.0
    %375 = vmatprep.subr.mxu0 0.0
    %376 = vmatpush1.msra.mxu0 0.0
    %377 = vmatprep.subr.mxu0 0.0
    %378 = vmatpush1.msra.mxu0 0.0
    %379 = vmatprep.subr.mxu0 0.0
    %380 = vmatpush1.msra.mxu0 0.0
    %381 = vmatprep.subr.mxu0 0.0
    %382 = vmatpush1.msra.mxu0 0.0
    %383 = vmatprep.subr.mxu0 0.0
    %384 = vmatpush1.msra.mxu0 0.0
    %385 = vmatprep.mubr.f32.mxu0 0.0
    %386 = vmatmul.mubr.f32.gmra.mrb[0].mxu0 %v298
    %v387 = vpop.f32.mrb[0].mxu0
    %v388 = vadd.f32 %v320, %v387
    %v389 = vpop.f32.mrb[0].mxu0
    %390 = vdwg.mxu0
    %v391 = vlaneseq
    %v392 = vand.u32 %v391, 127
    %vm393 = vcmp.lt.s32.totalorder %v392, 4
    %v394 = vsel %vm393, %v388, -1e+30
    %395 = vmax.xlane.f32.xlu0 %v394
    %v396 = vpop.xlane.xlu0 %395
    %v397 = vsub.f32 %v394, %v396
    %v398 = vmul.f32 %v397, 1.442695
    %v399 = vpow.pop %v398
    %v400 = vsel %vm393, %v399, 0.0
    %401 = vadd.xlane.f32.xlu0 %v400
    %v402 = vpop.xlane.xlu0 %401
    %v403 = vrcp.pop %v402
    %v404 = vmul.f32 %v400, %v403
    %405 = vst [vmem:[%s4] sm:$0xff] %v404
    // Predicated region
    $region22: #{nn_forward.1} parent=1 // pred_check
      _
    $region23: #{nn_forward.1} parent=1 // pred_check_branch
      %407 = sbr.rel (0) target = $region25
    $region24: #{nn_forward.1} parent=1 // pred_region
      _
    $region25: #{nn_forward.1} parent=1 // pred_fallthru
      _
    // Predicated region
    $region26: #{nn_forward.1} parent=1 // pred_check
      _
    $region27: #{nn_forward.1} parent=1 // pred_check_branch
      %409 = sbr.rel (0) target = $region29
    $region28: #{nn_forward.1} parent=1 // pred_region
      _
    $region29: #{nn_forward.1} parent=1 // pred_fallthru
      _
    %410 = vsyncpa [#allocation3], 1

</llo_original>
